<compile_context>
chip_gen: v7x
topology: tpu7x:2x2x1
jax: 0.10.0
libtpu: 0.0.40
codegen_flags: <defaults>
</compile_context>

<pallas_src>
import jax
import jax.numpy as jnp
from jax import lax
from jax.experimental import pallas as pl
from jax.experimental.pallas import tpu as pltpu


def _make_kernel(bag_tile, n_inst, feat, n_cls):
    K = n_cls * feat

    def kernel(x1_ref, x2_ref, wf_ref, o1_ref, o2_ref):
        wf = wf_ref[...]                                             # (F, K)
        # Hoisted: identical for both inputs and every bag in the tile.
        iota_n = lax.broadcasted_iota(jnp.int32, (bag_tile, n_inst, K), 1)

        def process(x_ref, o_ref):
            x_all = x_ref[...]                                       # (Bb*N, F)
            # One MXU matmul for the whole bag tile.  Column c*F+j of wf is
            # w[:, c], so class-c logits are replicated F times along lanes.
            logits = jnp.dot(x_all, wf,
                             preferred_element_type=jnp.float32)     # (Bb*N, K)
            # N == 8 keeps these reshapes on sublane-tile boundaries (free).
            logits = logits.reshape(bag_tile, n_inst, K)             # (Bb, N, K)
            xb = x_all.reshape(bag_tile, n_inst, feat)               # (Bb, N, F)
            # Lane-tiled copy of the bags: column c*F+f carries xb[..., f].
            x_t = jnp.tile(xb, (1, 1, n_cls))                        # (Bb, N, K)

            # First-occurrence argmax over the instance axis, per lane,
            # vectorized over the whole bag tile (3 sublane reduces total).
            max_v = jnp.max(logits, axis=1, keepdims=True)           # (Bb, 1, K)
            first = jnp.min(jnp.where(logits == max_v, iota_n, n_inst),
                            axis=1, keepdims=True)                   # (Bb, 1, K)
            onehot = iota_n == first                                 # (Bb, N, K)
            sel = jnp.sum(jnp.where(onehot, x_t, jnp.zeros_like(x_t)),
                          axis=1)                                    # (Bb, K)
            # Single full-tile, lane-dense, unmasked store.
            o_ref[...] = sel.astype(o_ref.dtype)

        process(x1_ref, o1_ref)
        process(x2_ref, o2_ref)

    return kernel


def _choose_bag_tile(batch, n_inst, feat, n_cls, itemsize,
                     vmem_budget=24 << 20, min_steps=4):
    """Pick bags-per-grid-step.

    Valid tiles: Bb == B, or Bb a multiple of 8 (keeps the (Bb, C*F) output
    block and the (Bb*N, F) input block 8-sublane aligned).  The tile is sized
    against an explicit double-buffered VMEM estimate (safe on v7x's 64 MiB),
    preferring >= `min_steps` grid steps so both v7x TensorCores get >= 2
    pipelined steps, falling back to >= 2 steps, then to a single step.
    """
    K = n_cls * feat

    def step_bytes(bb):
        io = 2 * 2 * bb * n_inst * feat * itemsize      # two inputs, dbuf
        io += 2 * 2 * bb * K * itemsize                 # two outputs, dbuf
        io += 2 * feat * K * itemsize                   # weight (tiny), dbuf
        tmp = 5 * bb * n_inst * K * 4                   # f32 in-kernel temps
        return io + tmp

    cands = sorted({bb for bb in range(1, batch + 1)
                    if batch % bb == 0 and (bb == batch or bb % 8 == 0)})
    fit = [bb for bb in cands if step_bytes(bb) <= vmem_budget]
    pool = fit if fit else cands[:1]
    for steps in (min_steps, 2, 1):
        ok = [bb for bb in pool if batch // bb >= steps]
        if ok:
            return max(ok)
    return max(pool)


def select_class_max_pallas_pair(x1, x2, w):
    """x1, x2: [B, N, F]; w: [F, C] (transposed nn.Linear weight).

    Returns (d, d1), each [B, C, F].
    """
    B, N, F = x1.shape
    C = w.shape[1]
    K = C * F
    Bb = _choose_bag_tile(B, N, F, C, jnp.dtype(x1.dtype).itemsize)
    grid = B // Bb

    # Column c*F+j of w_flat is w[:, c]; everything downstream stays lane-dense.
    w_flat = jnp.repeat(w, F, axis=1)                    # (F, C*F)
    x1_2d = x1.reshape(B * N, F)
    x2_2d = x2.reshape(B * N, F)

    kernel = _make_kernel(Bb, N, F, C)

    d_flat, d1_flat = pl.pallas_call(
        kernel,
        out_shape=(jax.ShapeDtypeStruct((B, K), x1.dtype),
                   jax.ShapeDtypeStruct((B, K), x2.dtype)),
        grid_spec=pltpu.PrefetchScalarGridSpec(
            num_scalar_prefetch=0,
            grid=(grid,),
            in_specs=[
                pl.BlockSpec((Bb * N, F), lambda i: (i, 0)),
                pl.BlockSpec((Bb * N, F), lambda i: (i, 0)),
                # Grid-invariant (constant index_map) weight; tiny.
                pl.BlockSpec((F, K), lambda i: (0, 0)),
            ],
            out_specs=[
                pl.BlockSpec((Bb, K), lambda i: (i, 0)),
                pl.BlockSpec((Bb, K), lambda i: (i, 0)),
            ],
        ),
        compiler_params=pltpu.CompilerParams(
            dimension_semantics=("parallel",),
            vmem_limit_bytes=32 * 1024 * 1024,
        ),
    )(x1_2d, x2_2d, w_flat)

    return d_flat.reshape(B, C, F), d1_flat.reshape(B, C, F)


def select_class_max_forward(x1, x2, w, b=None):
    """Mirrors select_class_max.forward: returns (d, d1).

    The bias `b` is accepted for API parity but not used in the kernel: a
    per-class constant added to every instance's logit cannot change the
    per-class argmax, so the selected rows (and hence the outputs) are
    identical.  Dropout(p=0.0) is an identity and is omitted.
    """
    del b
    return select_class_max_pallas_pair(x1, x2, w)


def _reference(x, w, b):
    # Pure-JAX reference for correctness checking (includes the bias, as in
    # the PyTorch module — it does not change the selection).
    logits = jnp.einsum("bnf,fc->bnc", x, w) + b[None, None, :]
    idx = jnp.argmax(logits, axis=1)                          # (B, C)
    return jnp.take_along_axis(x, idx[:, :, None], axis=1)    # (B, C, F)


if __name__ == "__main__":
    B, N, F, C = 16, 8, 32, 4     # bags, instances/bag, feature_size, output_class

    key = jax.random.PRNGKey(0)
    k_x1, k_x2, k_w, k_b = jax.random.split(key, 4)

    x1 = jax.random.normal(k_x1, (B, N, F), dtype=jnp.float32)
    x2 = jax.random.normal(k_x2, (B, N, F), dtype=jnp.float32)

    # nn.Linear default init: U(-1/sqrt(F), 1/sqrt(F)); stored as [F, C].
    bound = 1.0 / (F ** 0.5)
    w = jax.random.uniform(k_w, (F, C), dtype=jnp.float32,
                           minval=-bound, maxval=bound)
    b = jax.random.uniform(k_b, (C,), dtype=jnp.float32,
                           minval=-bound, maxval=bound)

    d, d1 = select_class_max_forward(x1, x2, w, b)
    jax.block_until_ready((d, d1))

    ref_d = _reference(x1, w, b)
    ref_d1 = _reference(x2, w, b)
    assert d.shape == (B, C, F) and d1.shape == (B, C, F)
    assert jnp.allclose(d, ref_d, atol=1e-5), "x1 branch mismatch"
    assert jnp.allclose(d1, ref_d1, atol=1e-5), "x2 branch mismatch"

    print("KERNEL_OK")
</pallas_src>

<mosaic_0001>
module attributes {stable_mosaic.version = 11 : i64} {
  func.func @kernel(%arg0: i32, %arg1: memref<64x32xf32, #tpu.memory_space<vmem>>, %arg2: memref<64x32xf32, #tpu.memory_space<vmem>>, %arg3: memref<32x128xf32, #tpu.memory_space<vmem>>, %arg4: memref<8x128xf32, #tpu.memory_space<vmem>>, %arg5: memref<8x128xf32, #tpu.memory_space<vmem>>) attributes {dimension_semantics = [#tpu.dimension_semantics<parallel>], iteration_bounds = array<i64: 2>, scalar_prefetch = 0 : i64, scratch_operands = 0 : i64, tpu.core_type = #tpu.core_type<tc>, window_params = [{transform_indices = @transform_0, window_bounds = array<i64: 64, 32>}, {transform_indices = @transform_1, window_bounds = array<i64: 64, 32>}, {pipeline_mode = #tpu.pipeline_mode<synchronous>, transform_indices = @transform_2, window_bounds = array<i64: 32, 128>}, {transform_indices = @transform_3, window_bounds = array<i64: 8, 128>}, {transform_indices = @transform_4, window_bounds = array<i64: 8, 128>}]} {
    %c0 = arith.constant 0 : index
    %c0_0 = arith.constant 0 : index
    %0 = vector.load %arg3[%c0, %c0_0] : memref<32x128xf32, #tpu.memory_space<vmem>>, vector<32x128xf32>
    %1 = tpu.iota {dimensions = array<i32: 1>} : vector<8x8x128xi32>
    %c0_1 = arith.constant 0 : index
    %c0_2 = arith.constant 0 : index
    %2 = vector.load %arg1[%c0_1, %c0_2] : memref<64x32xf32, #tpu.memory_space<vmem>>, vector<64x32xf32>
    %cst = arith.constant dense<0.000000e+00> : vector<64x128xf32>
    %3 = tpu.matmul %2, %0, %cst {dimension_numbers = #tpu.dot_dimension_numbers<[1], [0], [0], [1], [0, 0, 1, 1], [], []>} : vector<64x32xf32>, vector<32x128xf32>, vector<64x128xf32> -> vector<64x128xf32>
    %4 = vector.shape_cast %3 : vector<64x128xf32> to vector<8x8x128xf32>
    %5 = vector.shape_cast %2 : vector<64x32xf32> to vector<8x8x32xf32>
    %6 = tpu.concatenate %5, %5, %5, %5 in 2 : vector<8x8x32xf32>, vector<8x8x32xf32>, vector<8x8x32xf32>, vector<8x8x32xf32> -> vector<8x8x128xf32>
    %cst_3 = arith.constant dense<0xFF800000> : vector<8x128xf32>
    %7 = vector.multi_reduction <maximumf>, %4, %cst_3 [1] : vector<8x8x128xf32> to vector<8x128xf32>
    %8 = vector.shape_cast %7 : vector<8x128xf32> to vector<8x1x128xf32>
    %9 = vector.broadcast %8 : vector<8x1x128xf32> to vector<8x8x128xf32>
    %10 = arith.cmpf oeq, %4, %9 : vector<8x8x128xf32>
    %c8_i32 = arith.constant 8 : i32
    %11 = vector.broadcast %c8_i32 : i32 to vector<8x8x128xi32>
    %12 = arith.select %10, %1, %11 : vector<8x8x128xi1>, vector<8x8x128xi32>
    %cst_4 = arith.constant dense<2147483647> : vector<8x128xi32>
    %13 = vector.multi_reduction <minsi>, %12, %cst_4 [1] : vector<8x8x128xi32> to vector<8x128xi32>
    %14 = vector.shape_cast %13 : vector<8x128xi32> to vector<8x1x128xi32>
    %15 = vector.broadcast %14 : vector<8x1x128xi32> to vector<8x8x128xi32>
    %16 = arith.cmpi eq, %1, %15 : vector<8x8x128xi32>
    %cst_5 = arith.constant 0.000000e+00 : f32
    %17 = vector.broadcast %cst_5 : f32 to vector<8x8x128xf32>
    %18 = arith.select %16, %6, %17 : vector<8x8x128xi1>, vector<8x8x128xf32>
    %cst_6 = arith.constant dense<0.000000e+00> : vector<8x128xf32>
    %19 = vector.multi_reduction <add>, %18, %cst_6 [1] : vector<8x8x128xf32> to vector<8x128xf32>
    %c0_7 = arith.constant 0 : index
    %c0_8 = arith.constant 0 : index
    %20 = vector.load %arg4[%c0_7, %c0_8] : memref<8x128xf32, #tpu.memory_space<vmem>>, vector<8x128xf32>
    tpu.vector_store %arg4[%c0_7, %c0_8], %19 {strides = array<i32>} : memref<8x128xf32, #tpu.memory_space<vmem>>, vector<8x128xf32>,
    %c0_9 = arith.constant 0 : index
    %c0_10 = arith.constant 0 : index
    %21 = vector.load %arg2[%c0_9, %c0_10] : memref<64x32xf32, #tpu.memory_space<vmem>>, vector<64x32xf32>
    %cst_11 = arith.constant dense<0.000000e+00> : vector<64x128xf32>
    %22 = tpu.matmul %21, %0, %cst_11 {dimension_numbers = #tpu.dot_dimension_numbers<[1], [0], [0], [1], [0, 0, 1, 1], [], []>} : vector<64x32xf32>, vector<32x128xf32>, vector<64x128xf32> -> vector<64x128xf32>
    %23 = vector.shape_cast %22 : vector<64x128xf32> to vector<8x8x128xf32>
    %24 = vector.shape_cast %21 : vector<64x32xf32> to vector<8x8x32xf32>
    %25 = tpu.concatenate %24, %24, %24, %24 in 2 : vector<8x8x32xf32>, vector<8x8x32xf32>, vector<8x8x32xf32>, vector<8x8x32xf32> -> vector<8x8x128xf32>
    %cst_12 = arith.constant dense<0xFF800000> : vector<8x128xf32>
    %26 = vector.multi_reduction <maximumf>, %23, %cst_12 [1] : vector<8x8x128xf32> to vector<8x128xf32>
    %27 = vector.shape_cast %26 : vector<8x128xf32> to vector<8x1x128xf32>
    %28 = vector.broadcast %27 : vector<8x1x128xf32> to vector<8x8x128xf32>
    %29 = arith.cmpf oeq, %23, %28 : vector<8x8x128xf32>
    %c8_i32_13 = arith.constant 8 : i32
    %30 = vector.broadcast %c8_i32_13 : i32 to vector<8x8x128xi32>
    %31 = arith.select %29, %1, %30 : vector<8x8x128xi1>, vector<8x8x128xi32>
    %cst_14 = arith.constant dense<2147483647> : vector<8x128xi32>
    %32 = vector.multi_reduction <minsi>, %31, %cst_14 [1] : vector<8x8x128xi32> to vector<8x128xi32>
    %33 = vector.shape_cast %32 : vector<8x128xi32> to vector<8x1x128xi32>
    %34 = vector.broadcast %33 : vector<8x1x128xi32> to vector<8x8x128xi32>
    %35 = arith.cmpi eq, %1, %34 : vector<8x8x128xi32>
    %cst_15 = arith.constant 0.000000e+00 : f32
    %36 = vector.broadcast %cst_15 : f32 to vector<8x8x128xf32>
    %37 = arith.select %35, %25, %36 : vector<8x8x128xi1>, vector<8x8x128xf32>
    %cst_16 = arith.constant dense<0.000000e+00> : vector<8x128xf32>
    %38 = vector.multi_reduction <add>, %37, %cst_16 [1] : vector<8x8x128xf32> to vector<8x128xf32>
    %c0_17 = arith.constant 0 : index
    %c0_18 = arith.constant 0 : index
    %39 = vector.load %arg5[%c0_17, %c0_18] : memref<8x128xf32, #tpu.memory_space<vmem>>, vector<8x128xf32>
    tpu.vector_store %arg5[%c0_17, %c0_18], %38 {strides = array<i32>} : memref<8x128xf32, #tpu.memory_space<vmem>>, vector<8x128xf32>,
    return
  }
  func.func @transform_0(%arg0: i32) -> (i32, i32) {
    %c0_i32 = arith.constant 0 : i32
    %c0_i32_0 = arith.constant 0 : i32
    return %arg0, %c0_i32 : i32, i32
  }
  func.func @transform_1(%arg0: i32) -> (i32, i32) {
    %c0_i32 = arith.constant 0 : i32
    %c0_i32_0 = arith.constant 0 : i32
    return %arg0, %c0_i32 : i32, i32
  }
  func.func @transform_2(%arg0: i32) -> (i32, i32) {
    %c0_i32 = arith.constant 0 : i32
    %c0_i32_0 = arith.constant 0 : i32
    %c0_i32_1 = arith.constant 0 : i32
    return %c0_i32, %c0_i32_0 : i32, i32
  }
  func.func @transform_3(%arg0: i32) -> (i32, i32) {
    %c0_i32 = arith.constant 0 : i32
    %c0_i32_0 = arith.constant 0 : i32
    return %arg0, %c0_i32 : i32, i32
  }
  func.func @transform_4(%arg0: i32) -> (i32, i32) {
    %c0_i32 = arith.constant 0 : i32
    %c0_i32_0 = arith.constant 0 : i32
    return %arg0, %c0_i32 : i32, i32
  }
}

</mosaic_0001>

<llo_original>
// kernel: tpu_custom_call.1
$region0: #{tpu_custom_call.1}
  #allocation0 [shape = 'u32[]', space=smem, size = 0x4, offset = 0x4, fixed_abs, tag = 'smem constant byte address 0x4 - core index']
  #allocation1 [shape = 'u32[144,128]{1,0:T(1,128)}', space=vmem, size = 0x12000, scoped, tag = 'internal scratch']
  %s0 = inlined_call_operand.vmem [shape: f32[128,32], index: 0, kind: input, shape index: {}]
  %s1 = inlined_call_operand.vmem [shape: f32[128,32], index: 1, kind: input, shape index: {}]
  %s2 = inlined_call_operand.vmem [shape: f32[32,128], index: 2, kind: input, shape index: {}]
  %s3 = inlined_call_operand.hbm [shape: f32[16,128], index: 3, kind: output, shape index: {0}]
  %s4 = inlined_call_operand.hbm [shape: f32[16,128], index: 4, kind: output, shape index: {1}]
  %5 = xla_tuple %s3, %s4
  %s6 = sld [smem:[#allocation0]]
  $region53: #{tpu_custom_call.1} parent=0
    _
  %s8 = ssub.s32 1, %s6
  %s9 = scalar_select 0, %s8, %s6
  $region1: #{tpu_custom_call.1} parent=0
    #allocation2 [shape = 'u8[8192]{0}', space=vmem, size = 0x2000, scoped, tag = 'output window, operand 0']
    #allocation3 [shape = 's32[2]{0}', space=sflag, size = 0x8, scoped, tag = 'scoped memory for tpu_custom_call.1']
    #allocation4 [shape = 'u8[8192]{0}', space=vmem, size = 0x2000, scoped, tag = 'output window, operand 1']
    #allocation5 [shape = 's32[2]{0}', space=sflag, size = 0x8, scoped, tag = 'scoped memory for tpu_custom_call.1']
    %10 = vsyncpa [#allocation3], 0
    %s11 = scalar_lea.sflag [#allocation3], 1
    %12 = vsyncpa %s11, 0
    %13 = vsyncpa [#allocation5], 0
    %s14 = scalar_lea.sflag [#allocation5], 1
    %15 = vsyncpa %s14, 0
    loop: start=0, step=1, limit=4
    $region2: #{tpu_custom_call.1} parent=1 // loop_pre_header
      _
    $region3: #{tpu_custom_call.1} parent=1 // loop_header
      %s17 = sphi 0, %s21
      %p18 = scmp.ge.s32.totalorder %s17, 4
      %s27 = sphi 0, %s29
      %s30 = sphi 0, %s27
      %s31 = sphi 0, %s30
      %s47 = sphi 0, %s31
      %s53 = sphi 0, %s55
      %s56 = sphi 0, %s53
      %s57 = sphi 0, %s56
      %s73 = sphi 0, %s57
      %s77 = sphi 0, %s77
      %s79 = sphi 0, %s77
      %s80 = sphi 0, %s79
      %s94 = sphi 0, %s80
      %s100 = sphi 0, %s102
      %s103 = sphi 0, %s100
      %s104 = sphi 0, %s103
      %s120 = sphi 0, %s104
      %s126 = sphi 0, %s128
      %s129 = sphi 0, %s126
      %s130 = sphi 0, %s129
      %s146 = sphi 0, %s130
    $region4: #{tpu_custom_call.1} parent=1 // loop_header_branch
      %20 = sbr.rel (%p18) target = $region8
    $region5: #{tpu_custom_call.1} parent=1 // loop_body
      %s22 = ssub.s32 %s17, 1
      %s23 = ssub.s32 %s17, 2
      %s24 = sadd.s32 %s17, 1
      %s25 = ssub.s32 %s17, %s24
      %p26 = scmp.eq.s32.totalorder %s25, 0
      %s28 = sadd.s32 %s27, 1
      %s29 = scalar_select %p26, %s27, %s28
      %p32 = pneg %p26
      %p33 = scmp.eq.s32.totalorder %s17, 1
      %p34 = por %p32, %p33
      %p35 = scmp.ne.s32.totalorder %s27, %s30
      %p36 = scmp.eq.s32.totalorder %s17, 0
      %p37 = por %p35, %p36
      %p38 = scmp.ne.s32.totalorder %s27, %s30
      %p39 = scmp.eq.s32.totalorder %s22, 1
      %p40 = por %p38, %p39
      %p41 = scmp.ne.s32.totalorder %s30, %s31
      %p42 = scmp.eq.s32.totalorder %s22, 0
      %p43 = por %p41, %p42
      %p44 = scmp.ne.s32.totalorder %s30, %s31
      %p45 = scmp.eq.s32.totalorder %s23, 1
      %p46 = por %p44, %p45
      %p48 = scmp.ne.s32.totalorder %s31, %s47
      %p49 = scmp.eq.s32.totalorder %s23, 0
      %p50 = por %p48, %p49
      %s51 = ssub.s32 %s17, %s24
      %p52 = scmp.eq.s32.totalorder %s51, 0
      %s54 = sadd.s32 %s53, 1
      %s55 = scalar_select %p52, %s53, %s54
      %p58 = pneg %p52
      %p59 = scmp.eq.s32.totalorder %s17, 1
      %p60 = por %p58, %p59
      %p61 = scmp.ne.s32.totalorder %s53, %s56
      %p62 = scmp.eq.s32.totalorder %s17, 0
      %p63 = por %p61, %p62
      %p64 = scmp.ne.s32.totalorder %s53, %s56
      %p65 = scmp.eq.s32.totalorder %s22, 1
      %p66 = por %p64, %p65
      %p67 = scmp.ne.s32.totalorder %s56, %s57
      %p68 = scmp.eq.s32.totalorder %s22, 0
      %p69 = por %p67, %p68
      %p70 = scmp.ne.s32.totalorder %s56, %s57
      %p71 = scmp.eq.s32.totalorder %s23, 1
      %p72 = por %p70, %p71
      %p74 = scmp.ne.s32.totalorder %s57, %s73
      %p75 = scmp.eq.s32.totalorder %s23, 0
      %p76 = por %p74, %p75
      %s78 = sadd.s32 %s77, 1
      %p81 = scmp.eq.s32.totalorder %s17, 1
      %p82 = scmp.ne.s32.totalorder %s77, %s79
      %p83 = scmp.eq.s32.totalorder %s17, 0
      %p84 = por %p82, %p83
      %p85 = scmp.ne.s32.totalorder %s77, %s79
      %p86 = scmp.eq.s32.totalorder %s22, 1
      %p87 = por %p85, %p86
      %p88 = scmp.ne.s32.totalorder %s79, %s80
      %p89 = scmp.eq.s32.totalorder %s22, 0
      %p90 = por %p88, %p89
      %p91 = scmp.ne.s32.totalorder %s79, %s80
      %p92 = scmp.eq.s32.totalorder %s23, 1
      %p93 = por %p91, %p92
      %p95 = scmp.ne.s32.totalorder %s80, %s94
      %p96 = scmp.eq.s32.totalorder %s23, 0
      %p97 = por %p95, %p96
      %s98 = ssub.s32 %s17, %s24
      %p99 = scmp.eq.s32.totalorder %s98, 0
      %s101 = sadd.s32 %s100, 1
      %s102 = scalar_select %p99, %s100, %s101
      %p105 = pneg %p99
      %p106 = scmp.eq.s32.totalorder %s17, 1
      %p107 = por %p105, %p106
      %p108 = scmp.ne.s32.totalorder %s100, %s103
      %p109 = scmp.eq.s32.totalorder %s17, 0
      %p110 = por %p108, %p109
      %p111 = scmp.ne.s32.totalorder %s100, %s103
      %p112 = scmp.eq.s32.totalorder %s22, 1
      %p113 = por %p111, %p112
      %p114 = scmp.ne.s32.totalorder %s103, %s104
      %p115 = scmp.eq.s32.totalorder %s22, 0
      %p116 = por %p114, %p115
      %p117 = scmp.ne.s32.totalorder %s103, %s104
      %p118 = scmp.eq.s32.totalorder %s23, 1
      %p119 = por %p117, %p118
      %p121 = scmp.ne.s32.totalorder %s104, %s120
      %p122 = scmp.eq.s32.totalorder %s23, 0
      %p123 = por %p121, %p122
      %s124 = ssub.s32 %s17, %s24
      %p125 = scmp.eq.s32.totalorder %s124, 0
      %s127 = sadd.s32 %s126, 1
      %s128 = scalar_select %p125, %s126, %s127
      %p131 = pneg %p125
      %p132 = scmp.eq.s32.totalorder %s17, 1
      %p133 = por %p131, %p132
      %p134 = scmp.ne.s32.totalorder %s126, %s129
      %p135 = scmp.eq.s32.totalorder %s17, 0
      %p136 = por %p134, %p135
      %p137 = scmp.ne.s32.totalorder %s126, %s129
      %p138 = scmp.eq.s32.totalorder %s22, 1
      %p139 = por %p137, %p138
      %p140 = scmp.ne.s32.totalorder %s129, %s130
      %p141 = scmp.eq.s32.totalorder %s22, 0
      %p142 = por %p140, %p141
      %p143 = scmp.ne.s32.totalorder %s129, %s130
      %p144 = scmp.eq.s32.totalorder %s23, 1
      %p145 = por %p143, %p144
      %p147 = scmp.ne.s32.totalorder %s130, %s146
      %p148 = scmp.eq.s32.totalorder %s23, 0
      %p149 = por %p147, %p148
      %p150 = scmp.le.s32.totalorder 1, %s17
      %p151 = scmp.lt.s32.totalorder %s17, 3
      %p152 = pnand %p150, %p151
      %p153 = pneg %p152
      // Predicated region
      $region9: #{tpu_custom_call.1} parent=5 // pred_check
        _
      $region10: #{tpu_custom_call.1} parent=5 // pred_check_branch
        %155 = sbr.rel (%p152) target = $region12
      $region11: #{tpu_custom_call.1} parent=5 // pred_region
        %s156 = ssub.s32 %s17, 1
        // Predicated region
        $region13: #{tpu_custom_call.1} parent=11 // pred_check
          %p157 = pneg %p90
        $region14: #{tpu_custom_call.1} parent=11 // pred_check_branch
          %159 = sbr.rel (%p157) target = $region16
        $region15: #{tpu_custom_call.1} parent=11 // pred_region
          _
        $region16: #{tpu_custom_call.1} parent=11 // pred_fallthru
          _
      $region12: #{tpu_custom_call.1} parent=5 // pred_fallthru
        _
      %p160 = scmp.lt.s32.totalorder %s17, 2
      // Predicated region
      $region17: #{tpu_custom_call.1} parent=5 // pred_check
        %p161 = pneg %p160
      $region18: #{tpu_custom_call.1} parent=5 // pred_check_branch
        %163 = sbr.rel (%p161) target = $region20
      $region19: #{tpu_custom_call.1} parent=5 // pred_region
        // Predicated region
        $region21: #{tpu_custom_call.1} parent=19 // pred_check
          %p164 = pneg %p37
        $region22: #{tpu_custom_call.1} parent=19 // pred_check_branch
          %166 = sbr.rel (%p164) target = $region24
        $region23: #{tpu_custom_call.1} parent=19 // pred_region
          %s167 = smul.u32 8, %s17
          %p168 = scmp.lt.s32.totalorder %s167, 15
          %s169 = scalar_select %p168, %s167, 15
          %s170 = smul.addr %s169, 8
          %s171 = scalar_lea.vmem %s0, %s170
          %s172 = smul.u32 8, %s17
        $region24: #{tpu_custom_call.1} parent=19 // pred_fallthru
          _
        // Predicated region
        $region25: #{tpu_custom_call.1} parent=19 // pred_check
          %p173 = pneg %p63
        $region26: #{tpu_custom_call.1} parent=19 // pred_check_branch
          %175 = sbr.rel (%p173) target = $region28
        $region27: #{tpu_custom_call.1} parent=19 // pred_region
          %s176 = smul.u32 8, %s17
          %p177 = scmp.lt.s32.totalorder %s176, 15
          %s178 = scalar_select %p177, %s176, 15
          %s179 = smul.addr %s178, 8
          %s180 = scalar_lea.vmem %s1, %s179
          %s181 = smul.u32 8, %s17
        $region28: #{tpu_custom_call.1} parent=19 // pred_fallthru
          _
      $region20: #{tpu_custom_call.1} parent=5 // pred_fallthru
        _
      %p182 = scmp.le.s32.totalorder 1, %s17
      %p183 = scmp.lt.s32.totalorder %s17, 3
      %p184 = pnand %p182, %p183
      %p185 = pneg %p184
      // Predicated region
      $region29: #{tpu_custom_call.1} parent=5 // pred_check
        _
      $region30: #{tpu_custom_call.1} parent=5 // pred_check_branch
        %187 = sbr.rel (%p184) target = $region32
      $region31: #{tpu_custom_call.1} parent=5 // pred_region
        %s188 = ssub.s32 %s17, 1
        %s189 = smul.u32 8, %s22
        %p190 = scmp.lt.s32.totalorder %s189, 15
        %s191 = scalar_select %p190, %s189, 15
        %s192 = smul.addr %s191, 8
        %s193 = scalar_lea.vmem %s0, %s192
        %p194 = pneg %p43
        %p195 = pneg %p40
        %s196 = smul.u32 8, %s22
        %p197 = scmp.lt.s32.totalorder %s196, 15
        %s198 = scalar_select %p197, %s196, 15
        %s199 = smul.addr %s198, 8
        %s200 = scalar_lea.vmem %s1, %s199
        %p201 = pneg %p69
        %p202 = pneg %p66
        %p203 = pneg %p90
        %p204 = pneg %p87
        %p205 = pneg %p116
        %p206 = pneg %p113
        %s207 = sand.u32 %s103, 1
        %s208 = scalar_lea.sflag [#allocation3], %s207
        %s209 = sand.u32 %s103, 1
        %s210 = smul.addr %s209, 8
        %s211 = scalar_lea.vmem [#allocation2], %s210
        %p212 = pneg %p142
        %p213 = pneg %p139
        %s214 = sand.u32 %s129, 1
        %s215 = scalar_lea.sflag [#allocation5], %s214
        %s216 = sand.u32 %s129, 1
        %s217 = smul.addr %s216, 8
        %s218 = scalar_lea.vmem [#allocation4], %s217
        %s219 = smul.u32 8, %s22
        %p220 = scmp.lt.s32.totalorder %s219, 15
        %s221 = scalar_select %p220, %s219, 15
        %s222 = smul.addr %s221, 8
        %s223 = scalar_lea.vmem %s0, %s222
        %s224 = smul.u32 8, %s22
        %s225 = smul.u32 8, %s22
        %p226 = scmp.lt.s32.totalorder %s225, 15
        %s227 = scalar_select %p226, %s225, 15
        %s228 = smul.addr %s227, 8
        %s229 = scalar_lea.vmem %s1, %s228
        %s230 = smul.u32 8, %s22
        %v231 = vld [vmem:[%s2] sm:$0xff]
        %v232 = vld [vmem:[%s2 + $0x8] sm:$0xff]
        %v233 = vld [vmem:[%s2 + $0x10] sm:$0xff]
        %v234 = vld [vmem:[%s2 + $0x18] sm:$0xff]
        %v235 = vlaneseq
        %v236 = vshrl.u32 %v235, 7
        %v237 = vld [vmem:[%s223] sm:$0xff]
        %v238 = vld [vmem:[%s223 + $0x8] sm:$0xff]
        %v239 = vld [vmem:[%s223 + $0x10] sm:$0xff]
        %v240 = vld [vmem:[%s223 + $0x18] sm:$0xff]
        %v241 = vld [vmem:[%s223 + $0x20] sm:$0xff]
        %v242 = vld [vmem:[%s223 + $0x28] sm:$0xff]
        %v243 = vld [vmem:[%s223 + $0x30] sm:$0xff]
        %v244 = vld [vmem:[%s223 + $0x38] sm:$0xff]
        %vm245 = vcmask 261120
        %v247 = vsel %vm245, %v237, 0
        %v250 = vsel %vm245, %v238, 0
        %v253 = vsel %vm245, %v239, 0
        %v256 = vsel %vm245, %v240, 0
        %v259 = vsel %vm245, %v241, 0
        %v262 = vsel %vm245, %v242, 0
        %v265 = vsel %vm245, %v243, 0
        %v268 = vsel %vm245, %v244, 0
        %270 = vmatprep.subr.mxu0 0.0
        %271 = vmatpush1.msra.mxu0 %v231
        %272 = vmatprep.subr.mxu0 0.0
        %273 = vmatpush1.msra.mxu0 %v232
        %274 = vmatprep.subr.mxu0 0.0
        %275 = vmatpush1.msra.mxu0 %v233
        %276 = vmatprep.subr.mxu0 0.0
        %277 = vmatpush1.msra.mxu0 %v234
        %278 = vmatprep.subr.mxu0 0.0
        %279 = vmatpush1.msra.mxu0 0.0
        %280 = vmatprep.subr.mxu0 0.0
        %281 = vmatpush1.msra.mxu0 0.0
        %282 = vmatprep.subr.mxu0 0.0
        %283 = vmatpush1.msra.mxu0 0.0
        %284 = vmatprep.subr.mxu0 0.0
        %285 = vmatpush1.msra.mxu0 0.0
        %286 = vmatprep.subr.mxu0 0.0
        %287 = vmatpush1.msra.mxu0 0.0
        %288 = vmatprep.subr.mxu0 0.0
        %289 = vmatpush1.msra.mxu0 0.0
        %290 = vmatprep.subr.mxu0 0.0
        %291 = vmatpush1.msra.mxu0 0.0
        %292 = vmatprep.subr.mxu0 0.0
        %293 = vmatpush1.msra.mxu0 0.0
        %294 = vmatprep.subr.mxu0 0.0
        %295 = vmatpush1.msra.mxu0 0.0
        %296 = vmatprep.subr.mxu0 0.0
        %297 = vmatpush1.msra.mxu0 0.0
        %298 = vmatprep.subr.mxu0 0.0
        %299 = vmatpush1.msra.mxu0 0.0
        %300 = vmatprep.subr.mxu0 0.0
        %301 = vmatpush1.msra.mxu0 0.0
        %302 = vmatprep.subr.mxu0 0.0
        %303 = vmatpush1.msra.mxu0 0.0
        %304 = vmatprep.subr.mxu0 0.0
        %305 = vmatpush1.msra.mxu0 0.0
        %306 = vmatprep.subr.mxu0 0.0
        %307 = vmatpush1.msra.mxu0 0.0
        %308 = vmatprep.subr.mxu0 0.0
        %309 = vmatpush1.msra.mxu0 0.0
        %310 = vmatprep.subr.mxu0 0.0
        %311 = vmatpush1.msra.mxu0 0.0
        %312 = vmatprep.subr.mxu0 0.0
        %313 = vmatpush1.msra.mxu0 0.0
        %314 = vmatprep.subr.mxu0 0.0
        %315 = vmatpush1.msra.mxu0 0.0
        %316 = vmatprep.subr.mxu0 0.0
        %317 = vmatpush1.msra.mxu0 0.0
        %318 = vmatprep.subr.mxu0 0.0
        %319 = vmatpush1.msra.mxu0 0.0
        %320 = vmatprep.subr.mxu0 0.0
        %321 = vmatpush1.msra.mxu0 0.0
        %322 = vmatprep.subr.mxu0 0.0
        %323 = vmatpush1.msra.mxu0 0.0
        %324 = vmatprep.subr.mxu0 0.0
        %325 = vmatpush1.msra.mxu0 0.0
        %326 = vmatprep.subr.mxu0 0.0
        %327 = vmatpush1.msra.mxu0 0.0
        %328 = vmatprep.subr.mxu0 0.0
        %329 = vmatpush1.msra.mxu0 0.0
        %330 = vmatprep.subr.mxu0 0.0
        %331 = vmatpush1.msra.mxu0 0.0
        %332 = vmatprep.subr.mxu0 0.0
        %333 = vmatpush1.msra.mxu0 0.0
        %334 = vmatprep.mubr.f32.mxu0 0.0
        %335 = vmatmul.mubr.f32.gmra.mrb[0].mxu0 %v247
        %v336 = vpop.f32.mrb[0].mxu0
        %v337 = vadd.f32 0.0, %v336
        %v338 = vpop.f32.mrb[0].mxu0
        %339 = vmatprep.mubr.f32.mxu0 0.0
        %340 = vmatmul.mubr.f32.gmra.mrb[0].mxu0 %v250
        %v341 = vpop.f32.mrb[0].mxu0
        %v342 = vadd.f32 0.0, %v341
        %v343 = vpop.f32.mrb[0].mxu0
        %344 = vmatprep.mubr.f32.mxu0 0.0
        %345 = vmatmul.mubr.f32.gmra.mrb[0].mxu0 %v253
        %v346 = vpop.f32.mrb[0].mxu0
        %v347 = vadd.f32 0.0, %v346
        %v348 = vpop.f32.mrb[0].mxu0
        %349 = vmatprep.mubr.f32.mxu0 0.0
        %350 = vmatmul.mubr.f32.gmra.mrb[0].mxu0 %v256
        %v351 = vpop.f32.mrb[0].mxu0
        %v352 = vadd.f32 0.0, %v351
        %v353 = vpop.f32.mrb[0].mxu0
        %354 = vmatprep.mubr.f32.mxu0 0.0
        %355 = vmatmul.mubr.f32.gmra.mrb[0].mxu0 %v259
        %v356 = vpop.f32.mrb[0].mxu0
        %v357 = vadd.f32 0.0, %v356
        %v358 = vpop.f32.mrb[0].mxu0
        %359 = vmatprep.mubr.f32.mxu0 0.0
        %360 = vmatmul.mubr.f32.gmra.mrb[0].mxu0 %v262
        %v361 = vpop.f32.mrb[0].mxu0
        %v362 = vadd.f32 0.0, %v361
        %v363 = vpop.f32.mrb[0].mxu0
        %364 = vmatprep.mubr.f32.mxu0 0.0
        %365 = vmatmul.mubr.f32.gmra.mrb[0].mxu0 %v265
        %v366 = vpop.f32.mrb[0].mxu0
        %v367 = vadd.f32 0.0, %v366
        %v368 = vpop.f32.mrb[0].mxu0
        %369 = vmatprep.mubr.f32.mxu0 0.0
        %370 = vmatmul.mubr.f32.gmra.mrb[0].mxu0 %v268
        %v371 = vpop.f32.mrb[0].mxu0
        %v372 = vadd.f32 0.0, %v371
        %v373 = vpop.f32.mrb[0].mxu0
        %374 = vdwg.mxu0
        %375 = vrot.lane.b32.xlu0 %v237, 32
        %v376 = vpop.permute.xlu0 %375
        %377 = vrot.lane.b32.xlu0 %v238, 32
        %v378 = vpop.permute.xlu0 %377
        %379 = vrot.lane.b32.xlu0 %v239, 32
        %v380 = vpop.permute.xlu0 %379
        %381 = vrot.lane.b32.xlu0 %v240, 32
        %v382 = vpop.permute.xlu0 %381
        %383 = vrot.lane.b32.xlu0 %v241, 32
        %v384 = vpop.permute.xlu0 %383
        %385 = vrot.lane.b32.xlu0 %v242, 32
        %v386 = vpop.permute.xlu0 %385
        %387 = vrot.lane.b32.xlu0 %v243, 32
        %v388 = vpop.permute.xlu0 %387
        %389 = vrot.lane.b32.xlu0 %v244, 32
        %v390 = vpop.permute.xlu0 %389
        %399 = vrot.lane.b32.xlu0 %v237, 64
        %v400 = vpop.permute.xlu0 %399
        %401 = vrot.lane.b32.xlu0 %v238, 64
        %v402 = vpop.permute.xlu0 %401
        %403 = vrot.lane.b32.xlu0 %v239, 64
        %v404 = vpop.permute.xlu0 %403
        %405 = vrot.lane.b32.xlu0 %v240, 64
        %v406 = vpop.permute.xlu0 %405
        %407 = vrot.lane.b32.xlu0 %v241, 64
        %v408 = vpop.permute.xlu0 %407
        %409 = vrot.lane.b32.xlu0 %v242, 64
        %v410 = vpop.permute.xlu0 %409
        %411 = vrot.lane.b32.xlu0 %v243, 64
        %v412 = vpop.permute.xlu0 %411
        %413 = vrot.lane.b32.xlu0 %v244, 64
        %v414 = vpop.permute.xlu0 %413
        %423 = vrot.lane.b32.xlu0 %v237, 96
        %v424 = vpop.permute.xlu0 %423
        %425 = vrot.lane.b32.xlu0 %v238, 96
        %v426 = vpop.permute.xlu0 %425
        %427 = vrot.lane.b32.xlu0 %v239, 96
        %v428 = vpop.permute.xlu0 %427
        %429 = vrot.lane.b32.xlu0 %v240, 96
        %v430 = vpop.permute.xlu0 %429
        %431 = vrot.lane.b32.xlu0 %v241, 96
        %v432 = vpop.permute.xlu0 %431
        %433 = vrot.lane.b32.xlu0 %v242, 96
        %v434 = vpop.permute.xlu0 %433
        %435 = vrot.lane.b32.xlu0 %v243, 96
        %v436 = vpop.permute.xlu0 %435
        %437 = vrot.lane.b32.xlu0 %v244, 96
        %v438 = vpop.permute.xlu0 %437
        %v447 = vsel %vm245, %v237, %v376
        %v448 = vsel %vm245, %v238, %v378
        %v449 = vsel %vm245, %v239, %v380
        %v450 = vsel %vm245, %v240, %v382
        %v451 = vsel %vm245, %v241, %v384
        %v452 = vsel %vm245, %v242, %v386
        %v453 = vsel %vm245, %v243, %v388
        %v454 = vsel %vm245, %v244, %v390
        %vm455 = vcmask 523264
        %v456 = vsel %vm455, %v447, %v400
        %v457 = vsel %vm455, %v448, %v402
        %v458 = vsel %vm455, %v449, %v404
        %v459 = vsel %vm455, %v450, %v406
        %v460 = vsel %vm455, %v451, %v408
        %v461 = vsel %vm455, %v452, %v410
        %v462 = vsel %vm455, %v453, %v412
        %v463 = vsel %vm455, %v454, %v414
        %vm464 = vcmask 785408
        %v465 = vsel %vm464, %v456, %v424
        %v466 = vsel %vm464, %v457, %v426
        %v467 = vsel %vm464, %v458, %v428
        %v468 = vsel %vm464, %v459, %v430
        %v469 = vsel %vm464, %v460, %v432
        %v470 = vsel %vm464, %v461, %v434
        %v471 = vsel %vm464, %v462, %v436
        %v472 = vsel %vm464, %v463, %v438
        %v473 = vrot.slane %v337, 4
        %v474 = vmax.f32 %v337, %v473
        %v475 = vrot.slane %v474, 2
        %v476 = vmax.f32 %v474, %v475
        %v477 = vrot.slane %v476, 1
        %v478 = vmax.f32 %v476, %v477
        %v479 = vrot.slane %v342, 4
        %v480 = vmax.f32 %v342, %v479
        %v481 = vrot.slane %v480, 2
        %v482 = vmax.f32 %v480, %v481
        %v483 = vrot.slane %v482, 1
        %v484 = vmax.f32 %v482, %v483
        %v485 = vrot.slane %v347, 4
        %v486 = vmax.f32 %v347, %v485
        %v487 = vrot.slane %v486, 2
        %v488 = vmax.f32 %v486, %v487
        %v489 = vrot.slane %v488, 1
        %v490 = vmax.f32 %v488, %v489
        %v491 = vrot.slane %v352, 4
        %v492 = vmax.f32 %v352, %v491
        %v493 = vrot.slane %v492, 2
        %v494 = vmax.f32 %v492, %v493
        %v495 = vrot.slane %v494, 1
        %v496 = vmax.f32 %v494, %v495
        %v497 = vrot.slane %v357, 4
        %v498 = vmax.f32 %v357, %v497
        %v499 = vrot.slane %v498, 2
        %v500 = vmax.f32 %v498, %v499
        %v501 = vrot.slane %v500, 1
        %v502 = vmax.f32 %v500, %v501
        %v503 = vrot.slane %v362, 4
        %v504 = vmax.f32 %v362, %v503
        %v505 = vrot.slane %v504, 2
        %v506 = vmax.f32 %v504, %v505
        %v507 = vrot.slane %v506, 1
        %v508 = vmax.f32 %v506, %v507
        %v509 = vrot.slane %v367, 4
        %v510 = vmax.f32 %v367, %v509
        %v511 = vrot.slane %v510, 2
        %v512 = vmax.f32 %v510, %v511
        %v513 = vrot.slane %v512, 1
        %v514 = vmax.f32 %v512, %v513
        %v515 = vrot.slane %v372, 4
        %v516 = vmax.f32 %v372, %v515
        %v517 = vrot.slane %v516, 2
        %v518 = vmax.f32 %v516, %v517
        %v519 = vrot.slane %v518, 1
        %v520 = vmax.f32 %v518, %v519
        %vm521 = vcmp.eq.f32.partialorder %v337, %v478
        %vm522 = vcmp.eq.f32.partialorder %v342, %v484
        %vm523 = vcmp.eq.f32.partialorder %v347, %v490
        %vm524 = vcmp.eq.f32.partialorder %v352, %v496
        %vm525 = vcmp.eq.f32.partialorder %v357, %v502
        %vm526 = vcmp.eq.f32.partialorder %v362, %v508
        %vm527 = vcmp.eq.f32.partialorder %v367, %v514
        %vm528 = vcmp.eq.f32.partialorder %v372, %v520
        %v529 = vsel %vm521, %v236, 8
        %v530 = vsel %vm522, %v236, 8
        %v531 = vsel %vm523, %v236, 8
        %v532 = vsel %vm524, %v236, 8
        %v533 = vsel %vm525, %v236, 8
        %v534 = vsel %vm526, %v236, 8
        %v535 = vsel %vm527, %v236, 8
        %v536 = vsel %vm528, %v236, 8
        %v537 = vrot.slane %v529, 4
        %vm538 = vcmp.lt.s32.totalorder %v529, %v537
        %v539 = vsel %vm538, %v529, %v537
        %v540 = vrot.slane %v539, 2
        %vm541 = vcmp.lt.s32.totalorder %v539, %v540
        %v542 = vsel %vm541, %v539, %v540
        %v543 = vrot.slane %v542, 1
        %vm544 = vcmp.lt.s32.totalorder %v542, %v543
        %v545 = vsel %vm544, %v542, %v543
        %v546 = vrot.slane %v530, 4
        %vm547 = vcmp.lt.s32.totalorder %v530, %v546
        %v548 = vsel %vm547, %v530, %v546
        %v549 = vrot.slane %v548, 2
        %vm550 = vcmp.lt.s32.totalorder %v548, %v549
        %v551 = vsel %vm550, %v548, %v549
        %v552 = vrot.slane %v551, 1
        %vm553 = vcmp.lt.s32.totalorder %v551, %v552
        %v554 = vsel %vm553, %v551, %v552
        %v555 = vrot.slane %v531, 4
        %vm556 = vcmp.lt.s32.totalorder %v531, %v555
        %v557 = vsel %vm556, %v531, %v555
        %v558 = vrot.slane %v557, 2
        %vm559 = vcmp.lt.s32.totalorder %v557, %v558
        %v560 = vsel %vm559, %v557, %v558
        %v561 = vrot.slane %v560, 1
        %vm562 = vcmp.lt.s32.totalorder %v560, %v561
        %v563 = vsel %vm562, %v560, %v561
        %v564 = vrot.slane %v532, 4
        %vm565 = vcmp.lt.s32.totalorder %v532, %v564
        %v566 = vsel %vm565, %v532, %v564
        %v567 = vrot.slane %v566, 2
        %vm568 = vcmp.lt.s32.totalorder %v566, %v567
        %v569 = vsel %vm568, %v566, %v567
        %v570 = vrot.slane %v569, 1
        %vm571 = vcmp.lt.s32.totalorder %v569, %v570
        %v572 = vsel %vm571, %v569, %v570
        %v573 = vrot.slane %v533, 4
        %vm574 = vcmp.lt.s32.totalorder %v533, %v573
        %v575 = vsel %vm574, %v533, %v573
        %v576 = vrot.slane %v575, 2
        %vm577 = vcmp.lt.s32.totalorder %v575, %v576
        %v578 = vsel %vm577, %v575, %v576
        %v579 = vrot.slane %v578, 1
        %vm580 = vcmp.lt.s32.totalorder %v578, %v579
        %v581 = vsel %vm580, %v578, %v579
        %v582 = vrot.slane %v534, 4
        %vm583 = vcmp.lt.s32.totalorder %v534, %v582
        %v584 = vsel %vm583, %v534, %v582
        %v585 = vrot.slane %v584, 2
        %vm586 = vcmp.lt.s32.totalorder %v584, %v585
        %v587 = vsel %vm586, %v584, %v585
        %v588 = vrot.slane %v587, 1
        %vm589 = vcmp.lt.s32.totalorder %v587, %v588
        %v590 = vsel %vm589, %v587, %v588
        %v591 = vrot.slane %v535, 4
        %vm592 = vcmp.lt.s32.totalorder %v535, %v591
        %v593 = vsel %vm592, %v535, %v591
        %v594 = vrot.slane %v593, 2
        %vm595 = vcmp.lt.s32.totalorder %v593, %v594
        %v596 = vsel %vm595, %v593, %v594
        %v597 = vrot.slane %v596, 1
        %vm598 = vcmp.lt.s32.totalorder %v596, %v597
        %v599 = vsel %vm598, %v596, %v597
        %v600 = vrot.slane %v536, 4
        %vm601 = vcmp.lt.s32.totalorder %v536, %v600
        %v602 = vsel %vm601, %v536, %v600
        %v603 = vrot.slane %v602, 2
        %vm604 = vcmp.lt.s32.totalorder %v602, %v603
        %v605 = vsel %vm604, %v602, %v603
        %v606 = vrot.slane %v605, 1
        %vm607 = vcmp.lt.s32.totalorder %v605, %v606
        %v608 = vsel %vm607, %v605, %v606
        %vm609 = vcmp.eq.s32.totalorder %v236, %v545
        %vm610 = vcmp.eq.s32.totalorder %v236, %v554
        %vm611 = vcmp.eq.s32.totalorder %v236, %v563
        %vm612 = vcmp.eq.s32.totalorder %v236, %v572
        %vm613 = vcmp.eq.s32.totalorder %v236, %v581
        %vm614 = vcmp.eq.s32.totalorder %v236, %v590
        %vm615 = vcmp.eq.s32.totalorder %v236, %v599
        %vm616 = vcmp.eq.s32.totalorder %v236, %v608
        %v617 = vsel %vm609, %v465, 0.0
        %v618 = vsel %vm610, %v466, 0.0
        %v619 = vsel %vm611, %v467, 0.0
        %v620 = vsel %vm612, %v468, 0.0
        %v621 = vsel %vm613, %v469, 0.0
        %v622 = vsel %vm614, %v470, 0.0
        %v623 = vsel %vm615, %v471, 0.0
        %v624 = vsel %vm616, %v472, 0.0
        %v625 = vrot.slane %v617, 4
        %v626 = vadd.f32 %v617, %v625
        %v627 = vrot.slane %v626, 2
        %v628 = vadd.f32 %v626, %v627
        %v629 = vrot.slane %v628, 1
        %v630 = vadd.f32 %v628, %v629
        %v631 = vrot.slane %v618, 4
        %v632 = vadd.f32 %v618, %v631
        %v633 = vrot.slane %v632, 2
        %v634 = vadd.f32 %v632, %v633
        %v635 = vrot.slane %v634, 1
        %v636 = vadd.f32 %v634, %v635
        %v637 = vrot.slane %v619, 4
        %v638 = vadd.f32 %v619, %v637
        %v639 = vrot.slane %v638, 2
        %v640 = vadd.f32 %v638, %v639
        %v641 = vrot.slane %v640, 1
        %v642 = vadd.f32 %v640, %v641
        %v643 = vrot.slane %v620, 4
        %v644 = vadd.f32 %v620, %v643
        %v645 = vrot.slane %v644, 2
        %v646 = vadd.f32 %v644, %v645
        %v647 = vrot.slane %v646, 1
        %v648 = vadd.f32 %v646, %v647
        %v649 = vrot.slane %v621, 4
        %v650 = vadd.f32 %v621, %v649
        %v651 = vrot.slane %v650, 2
        %v652 = vadd.f32 %v650, %v651
        %v653 = vrot.slane %v652, 1
        %v654 = vadd.f32 %v652, %v653
        %v655 = vrot.slane %v622, 4
        %v656 = vadd.f32 %v622, %v655
        %v657 = vrot.slane %v656, 2
        %v658 = vadd.f32 %v656, %v657
        %v659 = vrot.slane %v658, 1
        %v660 = vadd.f32 %v658, %v659
        %v661 = vrot.slane %v623, 4
        %v662 = vadd.f32 %v623, %v661
        %v663 = vrot.slane %v662, 2
        %v664 = vadd.f32 %v662, %v663
        %v665 = vrot.slane %v664, 1
        %v666 = vadd.f32 %v664, %v665
        %v667 = vrot.slane %v624, 4
        %v668 = vadd.f32 %v624, %v667
        %v669 = vrot.slane %v668, 2
        %v670 = vadd.f32 %v668, %v669
        %v671 = vrot.slane %v670, 1
        %v672 = vadd.f32 %v670, %v671
        %vm681 = vcmask 1041409
        %v682 = vsel %vm681, %v636, %v630
        %vm683 = vcmask 1042434
        %v684 = vsel %vm683, %v642, %v682
        %vm685 = vcmask 1043459
        %v686 = vsel %vm685, %v648, %v684
        %vm687 = vcmask 1044484
        %v688 = vsel %vm687, %v654, %v686
        %vm689 = vcmask 1045509
        %v690 = vsel %vm689, %v660, %v688
        %vm691 = vcmask 1046534
        %v692 = vsel %vm691, %v666, %v690
        %vm693 = vcmask 1047559
        %v694 = vsel %vm693, %v672, %v692
        %696 = vst [vmem:[%s211] sm:$0xff] %v694
        %v697 = vld [vmem:[%s229] sm:$0xff]
        %v698 = vld [vmem:[%s229 + $0x8] sm:$0xff]
        %v699 = vld [vmem:[%s229 + $0x10] sm:$0xff]
        %v700 = vld [vmem:[%s229 + $0x18] sm:$0xff]
        %v701 = vld [vmem:[%s229 + $0x20] sm:$0xff]
        %v702 = vld [vmem:[%s229 + $0x28] sm:$0xff]
        %v703 = vld [vmem:[%s229 + $0x30] sm:$0xff]
        %v704 = vld [vmem:[%s229 + $0x38] sm:$0xff]
        %v706 = vsel %vm245, %v697, 0
        %v709 = vsel %vm245, %v698, 0
        %v712 = vsel %vm245, %v699, 0
        %v715 = vsel %vm245, %v700, 0
        %v718 = vsel %vm245, %v701, 0
        %v721 = vsel %vm245, %v702, 0
        %v724 = vsel %vm245, %v703, 0
        %v727 = vsel %vm245, %v704, 0
        %729 = vmatprep.subr.mxu0 0.0
        %730 = vmatpush1.msra.mxu0 %v231
        %731 = vmatprep.subr.mxu0 0.0
        %732 = vmatpush1.msra.mxu0 %v232
        %733 = vmatprep.subr.mxu0 0.0
        %734 = vmatpush1.msra.mxu0 %v233
        %735 = vmatprep.subr.mxu0 0.0
        %736 = vmatpush1.msra.mxu0 %v234
        %737 = vmatprep.subr.mxu0 0.0
        %738 = vmatpush1.msra.mxu0 0.0
        %739 = vmatprep.subr.mxu0 0.0
        %740 = vmatpush1.msra.mxu0 0.0
        %741 = vmatprep.subr.mxu0 0.0
        %742 = vmatpush1.msra.mxu0 0.0
        %743 = vmatprep.subr.mxu0 0.0
        %744 = vmatpush1.msra.mxu0 0.0
        %745 = vmatprep.subr.mxu0 0.0
        %746 = vmatpush1.msra.mxu0 0.0
        %747 = vmatprep.subr.mxu0 0.0
        %748 = vmatpush1.msra.mxu0 0.0
        %749 = vmatprep.subr.mxu0 0.0
        %750 = vmatpush1.msra.mxu0 0.0
        %751 = vmatprep.subr.mxu0 0.0
        %752 = vmatpush1.msra.mxu0 0.0
        %753 = vmatprep.subr.mxu0 0.0
        %754 = vmatpush1.msra.mxu0 0.0
        %755 = vmatprep.subr.mxu0 0.0
        %756 = vmatpush1.msra.mxu0 0.0
        %757 = vmatprep.subr.mxu0 0.0
        %758 = vmatpush1.msra.mxu0 0.0
        %759 = vmatprep.subr.mxu0 0.0
        %760 = vmatpush1.msra.mxu0 0.0
        %761 = vmatprep.subr.mxu0 0.0
        %762 = vmatpush1.msra.mxu0 0.0
        %763 = vmatprep.subr.mxu0 0.0
        %764 = vmatpush1.msra.mxu0 0.0
        %765 = vmatprep.subr.mxu0 0.0
        %766 = vmatpush1.msra.mxu0 0.0
        %767 = vmatprep.subr.mxu0 0.0
        %768 = vmatpush1.msra.mxu0 0.0
        %769 = vmatprep.subr.mxu0 0.0
        %770 = vmatpush1.msra.mxu0 0.0
        %771 = vmatprep.subr.mxu0 0.0
        %772 = vmatpush1.msra.mxu0 0.0
        %773 = vmatprep.subr.mxu0 0.0
        %774 = vmatpush1.msra.mxu0 0.0
        %775 = vmatprep.subr.mxu0 0.0
        %776 = vmatpush1.msra.mxu0 0.0
        %777 = vmatprep.subr.mxu0 0.0
        %778 = vmatpush1.msra.mxu0 0.0
        %779 = vmatprep.subr.mxu0 0.0
        %780 = vmatpush1.msra.mxu0 0.0
        %781 = vmatprep.subr.mxu0 0.0
        %782 = vmatpush1.msra.mxu0 0.0
        %783 = vmatprep.subr.mxu0 0.0
        %784 = vmatpush1.msra.mxu0 0.0
        %785 = vmatprep.subr.mxu0 0.0
        %786 = vmatpush1.msra.mxu0 0.0
        %787 = vmatprep.subr.mxu0 0.0
        %788 = vmatpush1.msra.mxu0 0.0
        %789 = vmatprep.subr.mxu0 0.0
        %790 = vmatpush1.msra.mxu0 0.0
        %791 = vmatprep.subr.mxu0 0.0
        %792 = vmatpush1.msra.mxu0 0.0
        %793 = vmatprep.mubr.f32.mxu0 0.0
        %794 = vmatmul.mubr.f32.gmra.mrb[0].mxu0 %v706
        %v795 = vpop.f32.mrb[0].mxu0
        %v796 = vadd.f32 0.0, %v795
        %v797 = vpop.f32.mrb[0].mxu0
        %798 = vmatprep.mubr.f32.mxu0 0.0
        %799 = vmatmul.mubr.f32.gmra.mrb[0].mxu0 %v709
        %v800 = vpop.f32.mrb[0].mxu0
        %v801 = vadd.f32 0.0, %v800
        %v802 = vpop.f32.mrb[0].mxu0
        %803 = vmatprep.mubr.f32.mxu0 0.0
        %804 = vmatmul.mubr.f32.gmra.mrb[0].mxu0 %v712
        %v805 = vpop.f32.mrb[0].mxu0
        %v806 = vadd.f32 0.0, %v805
        %v807 = vpop.f32.mrb[0].mxu0
        %808 = vmatprep.mubr.f32.mxu0 0.0
        %809 = vmatmul.mubr.f32.gmra.mrb[0].mxu0 %v715
        %v810 = vpop.f32.mrb[0].mxu0
        %v811 = vadd.f32 0.0, %v810
        %v812 = vpop.f32.mrb[0].mxu0
        %813 = vmatprep.mubr.f32.mxu0 0.0
        %814 = vmatmul.mubr.f32.gmra.mrb[0].mxu0 %v718
        %v815 = vpop.f32.mrb[0].mxu0
        %v816 = vadd.f32 0.0, %v815
        %v817 = vpop.f32.mrb[0].mxu0
        %818 = vmatprep.mubr.f32.mxu0 0.0
        %819 = vmatmul.mubr.f32.gmra.mrb[0].mxu0 %v721
        %v820 = vpop.f32.mrb[0].mxu0
        %v821 = vadd.f32 0.0, %v820
        %v822 = vpop.f32.mrb[0].mxu0
        %823 = vmatprep.mubr.f32.mxu0 0.0
        %824 = vmatmul.mubr.f32.gmra.mrb[0].mxu0 %v724
        %v825 = vpop.f32.mrb[0].mxu0
        %v826 = vadd.f32 0.0, %v825
        %v827 = vpop.f32.mrb[0].mxu0
        %828 = vmatprep.mubr.f32.mxu0 0.0
        %829 = vmatmul.mubr.f32.gmra.mrb[0].mxu0 %v727
        %v830 = vpop.f32.mrb[0].mxu0
        %v831 = vadd.f32 0.0, %v830
        %v832 = vpop.f32.mrb[0].mxu0
        %833 = vdwg.mxu0
        %834 = vrot.lane.b32.xlu0 %v697, 32
        %v835 = vpop.permute.xlu0 %834
        %836 = vrot.lane.b32.xlu0 %v698, 32
        %v837 = vpop.permute.xlu0 %836
        %838 = vrot.lane.b32.xlu0 %v699, 32
        %v839 = vpop.permute.xlu0 %838
        %840 = vrot.lane.b32.xlu0 %v700, 32
        %v841 = vpop.permute.xlu0 %840
        %842 = vrot.lane.b32.xlu0 %v701, 32
        %v843 = vpop.permute.xlu0 %842
        %844 = vrot.lane.b32.xlu0 %v702, 32
        %v845 = vpop.permute.xlu0 %844
        %846 = vrot.lane.b32.xlu0 %v703, 32
        %v847 = vpop.permute.xlu0 %846
        %848 = vrot.lane.b32.xlu0 %v704, 32
        %v849 = vpop.permute.xlu0 %848
        %858 = vrot.lane.b32.xlu0 %v697, 64
        %v859 = vpop.permute.xlu0 %858
        %860 = vrot.lane.b32.xlu0 %v698, 64
        %v861 = vpop.permute.xlu0 %860
        %862 = vrot.lane.b32.xlu0 %v699, 64
        %v863 = vpop.permute.xlu0 %862
        %864 = vrot.lane.b32.xlu0 %v700, 64
        %v865 = vpop.permute.xlu0 %864
        %866 = vrot.lane.b32.xlu0 %v701, 64
        %v867 = vpop.permute.xlu0 %866
        %868 = vrot.lane.b32.xlu0 %v702, 64
        %v869 = vpop.permute.xlu0 %868
        %870 = vrot.lane.b32.xlu0 %v703, 64
        %v871 = vpop.permute.xlu0 %870
        %872 = vrot.lane.b32.xlu0 %v704, 64
        %v873 = vpop.permute.xlu0 %872
        %882 = vrot.lane.b32.xlu0 %v697, 96
        %v883 = vpop.permute.xlu0 %882
        %884 = vrot.lane.b32.xlu0 %v698, 96
        %v885 = vpop.permute.xlu0 %884
        %886 = vrot.lane.b32.xlu0 %v699, 96
        %v887 = vpop.permute.xlu0 %886
        %888 = vrot.lane.b32.xlu0 %v700, 96
        %v889 = vpop.permute.xlu0 %888
        %890 = vrot.lane.b32.xlu0 %v701, 96
        %v891 = vpop.permute.xlu0 %890
        %892 = vrot.lane.b32.xlu0 %v702, 96
        %v893 = vpop.permute.xlu0 %892
        %894 = vrot.lane.b32.xlu0 %v703, 96
        %v895 = vpop.permute.xlu0 %894
        %896 = vrot.lane.b32.xlu0 %v704, 96
        %v897 = vpop.permute.xlu0 %896
        %v906 = vsel %vm245, %v697, %v835
        %v907 = vsel %vm245, %v698, %v837
        %v908 = vsel %vm245, %v699, %v839
        %v909 = vsel %vm245, %v700, %v841
        %v910 = vsel %vm245, %v701, %v843
        %v911 = vsel %vm245, %v702, %v845
        %v912 = vsel %vm245, %v703, %v847
        %v913 = vsel %vm245, %v704, %v849
        %v914 = vsel %vm455, %v906, %v859
        %v915 = vsel %vm455, %v907, %v861
        %v916 = vsel %vm455, %v908, %v863
        %v917 = vsel %vm455, %v909, %v865
        %v918 = vsel %vm455, %v910, %v867
        %v919 = vsel %vm455, %v911, %v869
        %v920 = vsel %vm455, %v912, %v871
        %v921 = vsel %vm455, %v913, %v873
        %v922 = vsel %vm464, %v914, %v883
        %v923 = vsel %vm464, %v915, %v885
        %v924 = vsel %vm464, %v916, %v887
        %v925 = vsel %vm464, %v917, %v889
        %v926 = vsel %vm464, %v918, %v891
        %v927 = vsel %vm464, %v919, %v893
        %v928 = vsel %vm464, %v920, %v895
        %v929 = vsel %vm464, %v921, %v897
        %v930 = vrot.slane %v796, 4
        %v931 = vmax.f32 %v796, %v930
        %v932 = vrot.slane %v931, 2
        %v933 = vmax.f32 %v931, %v932
        %v934 = vrot.slane %v933, 1
        %v935 = vmax.f32 %v933, %v934
        %v936 = vrot.slane %v801, 4
        %v937 = vmax.f32 %v801, %v936
        %v938 = vrot.slane %v937, 2
        %v939 = vmax.f32 %v937, %v938
        %v940 = vrot.slane %v939, 1
        %v941 = vmax.f32 %v939, %v940
        %v942 = vrot.slane %v806, 4
        %v943 = vmax.f32 %v806, %v942
        %v944 = vrot.slane %v943, 2
        %v945 = vmax.f32 %v943, %v944
        %v946 = vrot.slane %v945, 1
        %v947 = vmax.f32 %v945, %v946
        %v948 = vrot.slane %v811, 4
        %v949 = vmax.f32 %v811, %v948
        %v950 = vrot.slane %v949, 2
        %v951 = vmax.f32 %v949, %v950
        %v952 = vrot.slane %v951, 1
        %v953 = vmax.f32 %v951, %v952
        %v954 = vrot.slane %v816, 4
        %v955 = vmax.f32 %v816, %v954
        %v956 = vrot.slane %v955, 2
        %v957 = vmax.f32 %v955, %v956
        %v958 = vrot.slane %v957, 1
        %v959 = vmax.f32 %v957, %v958
        %v960 = vrot.slane %v821, 4
        %v961 = vmax.f32 %v821, %v960
        %v962 = vrot.slane %v961, 2
        %v963 = vmax.f32 %v961, %v962
        %v964 = vrot.slane %v963, 1
        %v965 = vmax.f32 %v963, %v964
        %v966 = vrot.slane %v826, 4
        %v967 = vmax.f32 %v826, %v966
        %v968 = vrot.slane %v967, 2
        %v969 = vmax.f32 %v967, %v968
        %v970 = vrot.slane %v969, 1
        %v971 = vmax.f32 %v969, %v970
        %v972 = vrot.slane %v831, 4
        %v973 = vmax.f32 %v831, %v972
        %v974 = vrot.slane %v973, 2
        %v975 = vmax.f32 %v973, %v974
        %v976 = vrot.slane %v975, 1
        %v977 = vmax.f32 %v975, %v976
        %vm978 = vcmp.eq.f32.partialorder %v796, %v935
        %vm979 = vcmp.eq.f32.partialorder %v801, %v941
        %vm980 = vcmp.eq.f32.partialorder %v806, %v947
        %vm981 = vcmp.eq.f32.partialorder %v811, %v953
        %vm982 = vcmp.eq.f32.partialorder %v816, %v959
        %vm983 = vcmp.eq.f32.partialorder %v821, %v965
        %vm984 = vcmp.eq.f32.partialorder %v826, %v971
        %vm985 = vcmp.eq.f32.partialorder %v831, %v977
        %v986 = vsel %vm978, %v236, 8
        %v987 = vsel %vm979, %v236, 8
        %v988 = vsel %vm980, %v236, 8
        %v989 = vsel %vm981, %v236, 8
        %v990 = vsel %vm982, %v236, 8
        %v991 = vsel %vm983, %v236, 8
        %v992 = vsel %vm984, %v236, 8
        %v993 = vsel %vm985, %v236, 8
        %v994 = vrot.slane %v986, 4
        %vm995 = vcmp.lt.s32.totalorder %v986, %v994
        %v996 = vsel %vm995, %v986, %v994
        %v997 = vrot.slane %v996, 2
        %vm998 = vcmp.lt.s32.totalorder %v996, %v997
        %v999 = vsel %vm998, %v996, %v997
        %v1000 = vrot.slane %v999, 1
        %vm1001 = vcmp.lt.s32.totalorder %v999, %v1000
        %v1002 = vsel %vm1001, %v999, %v1000
        %v1003 = vrot.slane %v987, 4
        %vm1004 = vcmp.lt.s32.totalorder %v987, %v1003
        %v1005 = vsel %vm1004, %v987, %v1003
        %v1006 = vrot.slane %v1005, 2
        %vm1007 = vcmp.lt.s32.totalorder %v1005, %v1006
        %v1008 = vsel %vm1007, %v1005, %v1006
        %v1009 = vrot.slane %v1008, 1
        %vm1010 = vcmp.lt.s32.totalorder %v1008, %v1009
        %v1011 = vsel %vm1010, %v1008, %v1009
        %v1012 = vrot.slane %v988, 4
        %vm1013 = vcmp.lt.s32.totalorder %v988, %v1012
        %v1014 = vsel %vm1013, %v988, %v1012
        %v1015 = vrot.slane %v1014, 2
        %vm1016 = vcmp.lt.s32.totalorder %v1014, %v1015
        %v1017 = vsel %vm1016, %v1014, %v1015
        %v1018 = vrot.slane %v1017, 1
        %vm1019 = vcmp.lt.s32.totalorder %v1017, %v1018
        %v1020 = vsel %vm1019, %v1017, %v1018
        %v1021 = vrot.slane %v989, 4
        %vm1022 = vcmp.lt.s32.totalorder %v989, %v1021
        %v1023 = vsel %vm1022, %v989, %v1021
        %v1024 = vrot.slane %v1023, 2
        %vm1025 = vcmp.lt.s32.totalorder %v1023, %v1024
        %v1026 = vsel %vm1025, %v1023, %v1024
        %v1027 = vrot.slane %v1026, 1
        %vm1028 = vcmp.lt.s32.totalorder %v1026, %v1027
        %v1029 = vsel %vm1028, %v1026, %v1027
        %v1030 = vrot.slane %v990, 4
        %vm1031 = vcmp.lt.s32.totalorder %v990, %v1030
        %v1032 = vsel %vm1031, %v990, %v1030
        %v1033 = vrot.slane %v1032, 2
        %vm1034 = vcmp.lt.s32.totalorder %v1032, %v1033
        %v1035 = vsel %vm1034, %v1032, %v1033
        %v1036 = vrot.slane %v1035, 1
        %vm1037 = vcmp.lt.s32.totalorder %v1035, %v1036
        %v1038 = vsel %vm1037, %v1035, %v1036
        %v1039 = vrot.slane %v991, 4
        %vm1040 = vcmp.lt.s32.totalorder %v991, %v1039
        %v1041 = vsel %vm1040, %v991, %v1039
        %v1042 = vrot.slane %v1041, 2
        %vm1043 = vcmp.lt.s32.totalorder %v1041, %v1042
        %v1044 = vsel %vm1043, %v1041, %v1042
        %v1045 = vrot.slane %v1044, 1
        %vm1046 = vcmp.lt.s32.totalorder %v1044, %v1045
        %v1047 = vsel %vm1046, %v1044, %v1045
        %v1048 = vrot.slane %v992, 4
        %vm1049 = vcmp.lt.s32.totalorder %v992, %v1048
        %v1050 = vsel %vm1049, %v992, %v1048
        %v1051 = vrot.slane %v1050, 2
        %vm1052 = vcmp.lt.s32.totalorder %v1050, %v1051
        %v1053 = vsel %vm1052, %v1050, %v1051
        %v1054 = vrot.slane %v1053, 1
        %vm1055 = vcmp.lt.s32.totalorder %v1053, %v1054
        %v1056 = vsel %vm1055, %v1053, %v1054
        %v1057 = vrot.slane %v993, 4
        %vm1058 = vcmp.lt.s32.totalorder %v993, %v1057
        %v1059 = vsel %vm1058, %v993, %v1057
        %v1060 = vrot.slane %v1059, 2
        %vm1061 = vcmp.lt.s32.totalorder %v1059, %v1060
        %v1062 = vsel %vm1061, %v1059, %v1060
        %v1063 = vrot.slane %v1062, 1
        %vm1064 = vcmp.lt.s32.totalorder %v1062, %v1063
        %v1065 = vsel %vm1064, %v1062, %v1063
        %vm1066 = vcmp.eq.s32.totalorder %v236, %v1002
        %vm1067 = vcmp.eq.s32.totalorder %v236, %v1011
        %vm1068 = vcmp.eq.s32.totalorder %v236, %v1020
        %vm1069 = vcmp.eq.s32.totalorder %v236, %v1029
        %vm1070 = vcmp.eq.s32.totalorder %v236, %v1038
        %vm1071 = vcmp.eq.s32.totalorder %v236, %v1047
        %vm1072 = vcmp.eq.s32.totalorder %v236, %v1056
        %vm1073 = vcmp.eq.s32.totalorder %v236, %v1065
        %v1074 = vsel %vm1066, %v922, 0.0
        %v1075 = vsel %vm1067, %v923, 0.0
        %v1076 = vsel %vm1068, %v924, 0.0
        %v1077 = vsel %vm1069, %v925, 0.0
        %v1078 = vsel %vm1070, %v926, 0.0
        %v1079 = vsel %vm1071, %v927, 0.0
        %v1080 = vsel %vm1072, %v928, 0.0
        %v1081 = vsel %vm1073, %v929, 0.0
        %v1082 = vrot.slane %v1074, 4
        %v1083 = vadd.f32 %v1074, %v1082
        %v1084 = vrot.slane %v1083, 2
        %v1085 = vadd.f32 %v1083, %v1084
        %v1086 = vrot.slane %v1085, 1
        %v1087 = vadd.f32 %v1085, %v1086
        %v1088 = vrot.slane %v1075, 4
        %v1089 = vadd.f32 %v1075, %v1088
        %v1090 = vrot.slane %v1089, 2
        %v1091 = vadd.f32 %v1089, %v1090
        %v1092 = vrot.slane %v1091, 1
        %v1093 = vadd.f32 %v1091, %v1092
        %v1094 = vrot.slane %v1076, 4
        %v1095 = vadd.f32 %v1076, %v1094
        %v1096 = vrot.slane %v1095, 2
        %v1097 = vadd.f32 %v1095, %v1096
        %v1098 = vrot.slane %v1097, 1
        %v1099 = vadd.f32 %v1097, %v1098
        %v1100 = vrot.slane %v1077, 4
        %v1101 = vadd.f32 %v1077, %v1100
        %v1102 = vrot.slane %v1101, 2
        %v1103 = vadd.f32 %v1101, %v1102
        %v1104 = vrot.slane %v1103, 1
        %v1105 = vadd.f32 %v1103, %v1104
        %v1106 = vrot.slane %v1078, 4
        %v1107 = vadd.f32 %v1078, %v1106
        %v1108 = vrot.slane %v1107, 2
        %v1109 = vadd.f32 %v1107, %v1108
        %v1110 = vrot.slane %v1109, 1
        %v1111 = vadd.f32 %v1109, %v1110
        %v1112 = vrot.slane %v1079, 4
        %v1113 = vadd.f32 %v1079, %v1112
        %v1114 = vrot.slane %v1113, 2
        %v1115 = vadd.f32 %v1113, %v1114
        %v1116 = vrot.slane %v1115, 1
        %v1117 = vadd.f32 %v1115, %v1116
        %v1118 = vrot.slane %v1080, 4
        %v1119 = vadd.f32 %v1080, %v1118
        %v1120 = vrot.slane %v1119, 2
        %v1121 = vadd.f32 %v1119, %v1120
        %v1122 = vrot.slane %v1121, 1
        %v1123 = vadd.f32 %v1121, %v1122
        %v1124 = vrot.slane %v1081, 4
        %v1125 = vadd.f32 %v1081, %v1124
        %v1126 = vrot.slane %v1125, 2
        %v1127 = vadd.f32 %v1125, %v1126
        %v1128 = vrot.slane %v1127, 1
        %v1129 = vadd.f32 %v1127, %v1128
        %v1138 = vsel %vm681, %v1093, %v1087
        %v1139 = vsel %vm683, %v1099, %v1138
        %v1140 = vsel %vm685, %v1105, %v1139
        %v1141 = vsel %vm687, %v1111, %v1140
        %v1142 = vsel %vm689, %v1117, %v1141
        %v1143 = vsel %vm691, %v1123, %v1142
        %v1144 = vsel %vm693, %v1129, %v1143
        %1146 = vst [vmem:[%s218] sm:$0xff] %v1144
        %s1147 = sand.u32 %s103, 1
        %s1148 = scalar_lea.sflag [#allocation3], %s1147
        %s1149 = sand.u32 %s103, 1
        %s1150 = smul.addr %s1149, 8
        %s1151 = scalar_lea.vmem [#allocation2], %s1150
        %s1152 = sand.u32 %s129, 1
        %s1153 = scalar_lea.sflag [#allocation5], %s1152
        %s1154 = sand.u32 %s129, 1
        %s1155 = smul.addr %s1154, 8
        %s1156 = scalar_lea.vmem [#allocation4], %s1155
        // Predicated region
        $region33: #{tpu_custom_call.1} parent=31 // pred_check
          %p1157 = pneg %p113
        $region34: #{tpu_custom_call.1} parent=31 // pred_check_branch
          %1159 = sbr.rel (%p1157) target = $region36
        $region35: #{tpu_custom_call.1} parent=31 // pred_region
          %s1161 = ssub.s32 128, 128
          %1162 = vsyncadd %s1148, %s1161
          %s1163 = smul.addr %s22, 128
          %s1164 = scalar_lea.hbm %s3, %s1163
          %s1166 = sshll.u32 %s1151, 4
          %s1167 = int_to_ptr.vmem [resolvable:$true] %s1166
          %1169 = dma.vmem_to_hbm [thread:$0]  %s1167, 128, %s1164, %s1148
        $region36: #{tpu_custom_call.1} parent=31 // pred_fallthru
          _
        // Predicated region
        $region37: #{tpu_custom_call.1} parent=31 // pred_check
          %p1170 = pneg %p139
        $region38: #{tpu_custom_call.1} parent=31 // pred_check_branch
          %1172 = sbr.rel (%p1170) target = $region40
        $region39: #{tpu_custom_call.1} parent=31 // pred_region
          %s1174 = ssub.s32 128, 128
          %1175 = vsyncadd %s1153, %s1174
          %s1176 = smul.addr %s22, 128
          %s1177 = scalar_lea.hbm %s4, %s1176
          %s1179 = sshll.u32 %s1156, 4
          %s1180 = int_to_ptr.vmem [resolvable:$true] %s1179
          %1182 = dma.vmem_to_hbm [thread:$0]  %s1180, 128, %s1177, %s1153
        $region40: #{tpu_custom_call.1} parent=31 // pred_fallthru
          _
      $region32: #{tpu_custom_call.1} parent=5 // pred_fallthru
        _
      %p1183 = scmp.le.s32.totalorder 2, %s17
      // Predicated region
      $region41: #{tpu_custom_call.1} parent=5 // pred_check
        %p1184 = pneg %p1183
      $region42: #{tpu_custom_call.1} parent=5 // pred_check_branch
        %1186 = sbr.rel (%p1184) target = $region44
      $region43: #{tpu_custom_call.1} parent=5 // pred_region
        %s1187 = ssub.s32 %s17, 2
        // Predicated region
        $region45: #{tpu_custom_call.1} parent=43 // pred_check
          %p1188 = pneg %p119
        $region46: #{tpu_custom_call.1} parent=43 // pred_check_branch
          %1190 = sbr.rel (%p1188) target = $region48
        $region47: #{tpu_custom_call.1} parent=43 // pred_region
          %s1191 = sand.u32 %s104, 1
          %s1192 = scalar_lea.sflag [#allocation3], %s1191
          %s1193 = sand.u32 %s104, 1
          %s1194 = smul.addr %s1193, 8
          %s1195 = scalar_lea.vmem [#allocation2], %s1194
          %1196 = dma.done %s1192, 128
        $region48: #{tpu_custom_call.1} parent=43 // pred_fallthru
          _
        // Predicated region
        $region49: #{tpu_custom_call.1} parent=43 // pred_check
          %p1197 = pneg %p145
        $region50: #{tpu_custom_call.1} parent=43 // pred_check_branch
          %1199 = sbr.rel (%p1197) target = $region52
        $region51: #{tpu_custom_call.1} parent=43 // pred_region
          %s1200 = sand.u32 %s130, 1
          %s1201 = scalar_lea.sflag [#allocation5], %s1200
          %s1202 = sand.u32 %s130, 1
          %s1203 = smul.addr %s1202, 8
          %s1204 = scalar_lea.vmem [#allocation4], %s1203
          %1205 = dma.done %s1201, 128
        $region52: #{tpu_custom_call.1} parent=43 // pred_fallthru
          _
      $region44: #{tpu_custom_call.1} parent=5 // pred_fallthru
        _
    $region6: #{tpu_custom_call.1} parent=1 // loop_footer
      %s21 = sadd.s32 1, %s17
    $region7: #{tpu_custom_call.1} parent=1 // loop_footer_branch
      %16 = sbr.rel target = $region3
    $region8: #{tpu_custom_call.1} parent=1 // loop_exit
      _
    %1206 = vsyncpa [#allocation3], 1
    %s1207 = scalar_lea.sflag [#allocation3], 1
    %1208 = vsyncpa %s1207, 1
    %1209 = vsyncpa [#allocation5], 1
    %s1210 = scalar_lea.sflag [#allocation5], 1
    %1211 = vsyncpa %s1210, 1

</llo_original>
